<compile_context>
chip_gen: v5e
topology: v5e:2x2
jax: 0.10.0
libtpu: 0.0.40
codegen_flags: <defaults>
</compile_context>

<pallas_src>
import functools

import jax
import jax.numpy as jnp
from jax.experimental import pallas as pl
from jax.experimental.pallas import tpu as pltpu

_EPS = 1e-5


def _im2col3(a, lpos, L):
    """a: (C, M) with M = N*L flattened row-major over (n, l).

    Returns (3*C, M) stacking [x(l-1); x(l); x(l+1)] per channel, with zeros at the
    per-sequence boundaries (Conv1d padding=1).  The boundary mask also prevents
    leakage across adjacent batches in the flattened layout.
    """
    C, M = a.shape
    z = jnp.zeros((C, 1), a.dtype)
    prev = jnp.concatenate([z, a[:, :M - 1]], axis=1)   # column m holds x[:, m-1]
    nxt = jnp.concatenate([a[:, 1:], z], axis=1)        # column m holds x[:, m+1]
    prev = jnp.where(lpos == 0, jnp.zeros_like(prev), prev)
    nxt = jnp.where(lpos == L - 1, jnp.zeros_like(nxt), nxt)
    return jnp.concatenate([prev, a, nxt], axis=0)


def _bn_rows(x, gamma, beta, inv_count):
    """Training-mode BatchNorm1d on (C, M) data: per-row (channel) stats over M
    columns (= all (N, L) positions), biased variance, single pass in f32."""
    s = jnp.sum(x, axis=1, keepdims=True)
    ss = jnp.sum(x * x, axis=1, keepdims=True)
    mean = s * inv_count
    var = jnp.maximum(ss * inv_count - mean * mean, 0.0)
    scale = jax.lax.rsqrt(var + _EPS) * gamma
    return (x - mean) * scale + beta


def basic_block_kernel(lpos_ref, x_ref, w1_ref, g1_ref, b1_ref,
                       w2_ref, g2_ref, b2_ref, ws_ref, gs_ref, bs_ref,
                       o_ref, *, L, matmul_dtype):
    M = x_ref.shape[1]
    inv_count = 1.0 / float(M)           # BN stats over all (N, L) positions

    lpos = lpos_ref[...]                 # (1, M) int32: l index of each flat column
    xm = x_ref[...]                      # (Cin, M), already in matmul_dtype

    # ---- conv1 (k=3, pad=1) as one MXU matmul -> bn1 -> relu ----
    x3 = _im2col3(xm, lpos, L)                                    # (3*Cin, M)
    out1 = jnp.dot(w1_ref[...], x3, preferred_element_type=jnp.float32)   # (P, M)
    act1 = jnp.maximum(_bn_rows(out1, g1_ref[...], b1_ref[...], inv_count), 0.0)

    # ---- conv2 (k=3, pad=1) as one MXU matmul -> bn2 ----
    a3 = _im2col3(act1.astype(matmul_dtype), lpos, L)             # (3*P, M)
    out2 = jnp.dot(w2_ref[...], a3, preferred_element_type=jnp.float32)   # (P, M)
    y2 = _bn_rows(out2, g2_ref[...], b2_ref[...], inv_count)

    # ---- shortcut option 'B': 1x1 conv + bn on the original input ----
    sc = jnp.dot(ws_ref[...], xm, preferred_element_type=jnp.float32)     # (P, M)
    ysc = _bn_rows(sc, gs_ref[...], bs_ref[...], inv_count)

    # ---- residual add + relu (single lane-dense store) ----
    o_ref[...] = jnp.maximum(y2 + ysc, 0.0)


def basic_block_forward(x, params, *, matmul_dtype=jnp.float32):
    """x: (N, C_in, L) float32 in PyTorch NCL layout. Returns (N, planes, L).

    matmul_dtype=jnp.bfloat16 is recommended on v6e/v7x for 2x MXU throughput
    (f32 accumulation is kept); the default f32 preserves exact conv numerics.
    """
    N, Cin, L = x.shape
    P = params['w1'].shape[0]                          # planes
    assert params['w1'].shape == (P, Cin, 3)
    M = N * L

    # NCL -> (channels, N*L): channels on sublanes, flattened batch*length on lanes.
    x2d = jnp.transpose(x, (1, 0, 2)).reshape(Cin, M).astype(matmul_dtype)
    # Per-column l index (used in-kernel to mask the conv halo taps).
    lpos = (jnp.arange(M, dtype=jnp.int32) % L).reshape(1, M)

    # Conv weights flattened for the fused-tap matmul: row block order = tap k,
    # matching the [prev; center; next] im2col row order.
    w1 = jnp.transpose(params['w1'], (0, 2, 1)).reshape(P, 3 * Cin).astype(matmul_dtype)
    w2 = jnp.transpose(params['w2'], (0, 2, 1)).reshape(P, 3 * P).astype(matmul_dtype)
    ws = params['ws'][:, :, 0].astype(matmul_dtype)    # (P, Cin)

    g1 = params['g1'].reshape(P, 1).astype(jnp.float32)
    b1 = params['b1'].reshape(P, 1).astype(jnp.float32)
    g2 = params['g2'].reshape(P, 1).astype(jnp.float32)
    b2 = params['b2'].reshape(P, 1).astype(jnp.float32)
    gs = params['gs'].reshape(P, 1).astype(jnp.float32)
    bs = params['bs'].reshape(P, 1).astype(jnp.float32)

    itm = jnp.dtype(matmul_dtype).itemsize
    flops = 2 * M * P * (3 * Cin + 3 * P + Cin) + 32 * M * P
    bytes_accessed = (itm * (M * Cin + P * (3 * Cin + 3 * P + Cin))
                      + 4 * (M + 6 * P + M * P))

    vmem = pl.BlockSpec(memory_space=pltpu.MemorySpace.VMEM)
    kernel = functools.partial(basic_block_kernel, L=L, matmul_dtype=matmul_dtype)

    out2d = pl.pallas_call(
        kernel,
        out_shape=jax.ShapeDtypeStruct((P, M), jnp.float32),
        in_specs=[vmem] * 11,
        out_specs=vmem,
        cost_estimate=pl.CostEstimate(flops=int(flops),
                                      transcendentals=int(3 * P),
                                      bytes_accessed=int(bytes_accessed)),
    )(lpos, x2d, w1, g1, b1, w2, g2, b2, ws, gs, bs)

    # (P, N*L) -> (N, P, L) back to PyTorch NCL layout.
    return jnp.transpose(out2d.reshape(P, N, L), (1, 0, 2))


if __name__ == "__main__":
    # BasicBlock(in_planes=4, planes=8, stride=1, option='B')  -> shortcut active
    N, Cin, P, L = 2, 4, 8, 16
    key = jax.random.PRNGKey(0)
    kx, k1, k2, k3 = jax.random.split(key, 4)

    x = jax.random.normal(kx, (N, Cin, L), jnp.float32)
    params = dict(
        # conv1: (planes, in_planes, 3), no bias
        w1=0.1 * jax.random.normal(k1, (P, Cin, 3), jnp.float32),
        g1=jnp.ones((P,), jnp.float32), b1=jnp.zeros((P,), jnp.float32),
        # conv2: (planes, planes, 3), no bias
        w2=0.1 * jax.random.normal(k2, (P, P, 3), jnp.float32),
        g2=jnp.ones((P,), jnp.float32), b2=jnp.zeros((P,), jnp.float32),
        # shortcut conv: (planes, in_planes, 1), no bias
        ws=0.1 * jax.random.normal(k3, (P, Cin, 1), jnp.float32),
        gs=jnp.ones((P,), jnp.float32), bs=jnp.zeros((P,), jnp.float32),
    )

    out = jax.jit(basic_block_forward)(x, params)
    jax.block_until_ready(out)
    assert out.shape == (N, P, L) and out.dtype == jnp.float32
    assert bool(jnp.all(jnp.isfinite(out)))
    print("KERNEL_OK")
</pallas_src>

<mosaic_0001>
module attributes {stable_mosaic.version = 11 : i64} {
  func.func @basic_block_kernel(%arg0: memref<1x32xi32, #tpu.memory_space<vmem>>, %arg1: memref<4x32xf32, #tpu.memory_space<vmem>>, %arg2: memref<8x12xf32, #tpu.memory_space<vmem>>, %arg3: memref<8x1xf32, #tpu.memory_space<vmem>>, %arg4: memref<8x1xf32, #tpu.memory_space<vmem>>, %arg5: memref<8x24xf32, #tpu.memory_space<vmem>>, %arg6: memref<8x1xf32, #tpu.memory_space<vmem>>, %arg7: memref<8x1xf32, #tpu.memory_space<vmem>>, %arg8: memref<8x4xf32, #tpu.memory_space<vmem>>, %arg9: memref<8x1xf32, #tpu.memory_space<vmem>>, %arg10: memref<8x1xf32, #tpu.memory_space<vmem>>, %arg11: memref<8x32xf32, #tpu.memory_space<vmem>>) attributes {dimension_semantics = [], scalar_prefetch = 0 : i64, scratch_operands = 0 : i64, tpu.core_type = #tpu.core_type<tc>} {
    %c0 = arith.constant 0 : index
    %c0_0 = arith.constant 0 : index
    %0 = vector.load %arg0[%c0, %c0_0] : memref<1x32xi32, #tpu.memory_space<vmem>>, vector<1x32xi32>
    %c0_1 = arith.constant 0 : index
    %c0_2 = arith.constant 0 : index
    %1 = vector.load %arg1[%c0_1, %c0_2] : memref<4x32xf32, #tpu.memory_space<vmem>>, vector<4x32xf32>
    %cst = arith.constant 0.000000e+00 : f32
    %2 = vector.broadcast %cst : f32 to vector<4x1xf32>
    %3 = vector.extract_strided_slice %1 {offsets = [0, 0], sizes = [4, 31], strides = [1, 1]} : vector<4x32xf32> to vector<4x31xf32>
    %4 = tpu.concatenate %2, %3 in 1 : vector<4x1xf32>, vector<4x31xf32> -> vector<4x32xf32>
    %5 = vector.extract_strided_slice %1 {offsets = [0, 1], sizes = [4, 31], strides = [1, 1]} : vector<4x32xf32> to vector<4x31xf32>
    %6 = tpu.concatenate %5, %2 in 1 : vector<4x31xf32>, vector<4x1xf32> -> vector<4x32xf32>
    %c0_i32 = arith.constant 0 : i32
    %7 = vector.broadcast %c0_i32 : i32 to vector<1x32xi32>
    %8 = arith.cmpi eq, %0, %7 : vector<1x32xi32>
    %cst_3 = arith.constant 0.000000e+00 : f32
    %9 = vector.broadcast %cst_3 : f32 to vector<4x32xf32>
    %10 = vector.shape_cast %8 : vector<1x32xi1> to vector<1x32xi1>
    %11 = vector.broadcast %10 : vector<1x32xi1> to vector<4x32xi1>
    %12 = arith.select %11, %9, %4 : vector<4x32xi1>, vector<4x32xf32>
    %c15_i32 = arith.constant 15 : i32
    %13 = vector.broadcast %c15_i32 : i32 to vector<1x32xi32>
    %14 = arith.cmpi eq, %0, %13 : vector<1x32xi32>
    %cst_4 = arith.constant 0.000000e+00 : f32
    %15 = vector.broadcast %cst_4 : f32 to vector<4x32xf32>
    %16 = vector.shape_cast %14 : vector<1x32xi1> to vector<1x32xi1>
    %17 = vector.broadcast %16 : vector<1x32xi1> to vector<4x32xi1>
    %18 = arith.select %17, %15, %6 : vector<4x32xi1>, vector<4x32xf32>
    %19 = tpu.concatenate %12, %1, %18 in 0 : vector<4x32xf32>, vector<4x32xf32>, vector<4x32xf32> -> vector<12x32xf32>
    %c0_5 = arith.constant 0 : index
    %c0_6 = arith.constant 0 : index
    %20 = vector.load %arg2[%c0_5, %c0_6] : memref<8x12xf32, #tpu.memory_space<vmem>>, vector<8x12xf32>
    %cst_7 = arith.constant dense<0.000000e+00> : vector<8x32xf32>
    %21 = tpu.matmul %20, %19, %cst_7 {dimension_numbers = #tpu.dot_dimension_numbers<[1], [0], [0], [1], [0, 0, 1, 1], [], []>} : vector<8x12xf32>, vector<12x32xf32>, vector<8x32xf32> -> vector<8x32xf32>
    %c0_8 = arith.constant 0 : index
    %c0_9 = arith.constant 0 : index
    %22 = vector.load %arg3[%c0_8, %c0_9] : memref<8x1xf32, #tpu.memory_space<vmem>>, vector<8x1xf32>
    %c0_10 = arith.constant 0 : index
    %c0_11 = arith.constant 0 : index
    %23 = vector.load %arg4[%c0_10, %c0_11] : memref<8x1xf32, #tpu.memory_space<vmem>>, vector<8x1xf32>
    %cst_12 = arith.constant dense<0.000000e+00> : vector<8xf32>
    %24 = vector.multi_reduction <add>, %21, %cst_12 [1] : vector<8x32xf32> to vector<8xf32>
    %25 = vector.shape_cast %24 : vector<8xf32> to vector<8x1xf32>
    %26 = arith.mulf %21, %21 : vector<8x32xf32>
    %cst_13 = arith.constant dense<0.000000e+00> : vector<8xf32>
    %27 = vector.multi_reduction <add>, %26, %cst_13 [1] : vector<8x32xf32> to vector<8xf32>
    %28 = vector.shape_cast %27 : vector<8xf32> to vector<8x1xf32>
    %cst_14 = arith.constant 3.125000e-02 : f32
    %29 = vector.broadcast %cst_14 : f32 to vector<8x1xf32>
    %30 = arith.mulf %25, %29 : vector<8x1xf32>
    %cst_15 = arith.constant 3.125000e-02 : f32
    %31 = vector.broadcast %cst_15 : f32 to vector<8x1xf32>
    %32 = arith.mulf %28, %31 : vector<8x1xf32>
    %33 = arith.mulf %30, %30 : vector<8x1xf32>
    %34 = arith.subf %32, %33 : vector<8x1xf32>
    %cst_16 = arith.constant 0.000000e+00 : f32
    %35 = vector.broadcast %cst_16 : f32 to vector<8x1xf32>
    %36 = arith.maximumf %34, %35 : vector<8x1xf32>
    %cst_17 = arith.constant 9.99999974E-6 : f32
    %37 = vector.broadcast %cst_17 : f32 to vector<8x1xf32>
    %38 = arith.addf %36, %37 : vector<8x1xf32>
    %39 = math.rsqrt %38 : vector<8x1xf32>
    %40 = arith.mulf %39, %22 : vector<8x1xf32>
    %41 = vector.broadcast %30 : vector<8x1xf32> to vector<8x32xf32>
    %42 = arith.subf %21, %41 : vector<8x32xf32>
    %43 = vector.broadcast %40 : vector<8x1xf32> to vector<8x32xf32>
    %44 = arith.mulf %42, %43 : vector<8x32xf32>
    %45 = vector.broadcast %23 : vector<8x1xf32> to vector<8x32xf32>
    %46 = arith.addf %44, %45 : vector<8x32xf32>
    %cst_18 = arith.constant 0.000000e+00 : f32
    %47 = vector.broadcast %cst_18 : f32 to vector<8x32xf32>
    %48 = arith.maximumf %46, %47 : vector<8x32xf32>
    %cst_19 = arith.constant 0.000000e+00 : f32
    %49 = vector.broadcast %cst_19 : f32 to vector<8x1xf32>
    %50 = vector.extract_strided_slice %48 {offsets = [0, 0], sizes = [8, 31], strides = [1, 1]} : vector<8x32xf32> to vector<8x31xf32>
    %51 = tpu.concatenate %49, %50 in 1 : vector<8x1xf32>, vector<8x31xf32> -> vector<8x32xf32>
    %52 = vector.extract_strided_slice %48 {offsets = [0, 1], sizes = [8, 31], strides = [1, 1]} : vector<8x32xf32> to vector<8x31xf32>
    %53 = tpu.concatenate %52, %49 in 1 : vector<8x31xf32>, vector<8x1xf32> -> vector<8x32xf32>
    %c0_i32_20 = arith.constant 0 : i32
    %54 = vector.broadcast %c0_i32_20 : i32 to vector<1x32xi32>
    %55 = arith.cmpi eq, %0, %54 : vector<1x32xi32>
    %cst_21 = arith.constant 0.000000e+00 : f32
    %56 = vector.broadcast %cst_21 : f32 to vector<8x32xf32>
    %57 = vector.shape_cast %55 : vector<1x32xi1> to vector<1x32xi1>
    %58 = vector.broadcast %57 : vector<1x32xi1> to vector<8x32xi1>
    %59 = arith.select %58, %56, %51 : vector<8x32xi1>, vector<8x32xf32>
    %c15_i32_22 = arith.constant 15 : i32
    %60 = vector.broadcast %c15_i32_22 : i32 to vector<1x32xi32>
    %61 = arith.cmpi eq, %0, %60 : vector<1x32xi32>
    %cst_23 = arith.constant 0.000000e+00 : f32
    %62 = vector.broadcast %cst_23 : f32 to vector<8x32xf32>
    %63 = vector.shape_cast %61 : vector<1x32xi1> to vector<1x32xi1>
    %64 = vector.broadcast %63 : vector<1x32xi1> to vector<8x32xi1>
    %65 = arith.select %64, %62, %53 : vector<8x32xi1>, vector<8x32xf32>
    %66 = tpu.concatenate %59, %48, %65 in 0 : vector<8x32xf32>, vector<8x32xf32>, vector<8x32xf32> -> vector<24x32xf32>
    %c0_24 = arith.constant 0 : index
    %c0_25 = arith.constant 0 : index
    %67 = vector.load %arg5[%c0_24, %c0_25] : memref<8x24xf32, #tpu.memory_space<vmem>>, vector<8x24xf32>
    %cst_26 = arith.constant dense<0.000000e+00> : vector<8x32xf32>
    %68 = tpu.matmul %67, %66, %cst_26 {dimension_numbers = #tpu.dot_dimension_numbers<[1], [0], [0], [1], [0, 0, 1, 1], [], []>} : vector<8x24xf32>, vector<24x32xf32>, vector<8x32xf32> -> vector<8x32xf32>
    %c0_27 = arith.constant 0 : index
    %c0_28 = arith.constant 0 : index
    %69 = vector.load %arg6[%c0_27, %c0_28] : memref<8x1xf32, #tpu.memory_space<vmem>>, vector<8x1xf32>
    %c0_29 = arith.constant 0 : index
    %c0_30 = arith.constant 0 : index
    %70 = vector.load %arg7[%c0_29, %c0_30] : memref<8x1xf32, #tpu.memory_space<vmem>>, vector<8x1xf32>
    %cst_31 = arith.constant dense<0.000000e+00> : vector<8xf32>
    %71 = vector.multi_reduction <add>, %68, %cst_31 [1] : vector<8x32xf32> to vector<8xf32>
    %72 = vector.shape_cast %71 : vector<8xf32> to vector<8x1xf32>
    %73 = arith.mulf %68, %68 : vector<8x32xf32>
    %cst_32 = arith.constant dense<0.000000e+00> : vector<8xf32>
    %74 = vector.multi_reduction <add>, %73, %cst_32 [1] : vector<8x32xf32> to vector<8xf32>
    %75 = vector.shape_cast %74 : vector<8xf32> to vector<8x1xf32>
    %cst_33 = arith.constant 3.125000e-02 : f32
    %76 = vector.broadcast %cst_33 : f32 to vector<8x1xf32>
    %77 = arith.mulf %72, %76 : vector<8x1xf32>
    %cst_34 = arith.constant 3.125000e-02 : f32
    %78 = vector.broadcast %cst_34 : f32 to vector<8x1xf32>
    %79 = arith.mulf %75, %78 : vector<8x1xf32>
    %80 = arith.mulf %77, %77 : vector<8x1xf32>
    %81 = arith.subf %79, %80 : vector<8x1xf32>
    %cst_35 = arith.constant 0.000000e+00 : f32
    %82 = vector.broadcast %cst_35 : f32 to vector<8x1xf32>
    %83 = arith.maximumf %81, %82 : vector<8x1xf32>
    %cst_36 = arith.constant 9.99999974E-6 : f32
    %84 = vector.broadcast %cst_36 : f32 to vector<8x1xf32>
    %85 = arith.addf %83, %84 : vector<8x1xf32>
    %86 = math.rsqrt %85 : vector<8x1xf32>
    %87 = arith.mulf %86, %69 : vector<8x1xf32>
    %88 = vector.broadcast %77 : vector<8x1xf32> to vector<8x32xf32>
    %89 = arith.subf %68, %88 : vector<8x32xf32>
    %90 = vector.broadcast %87 : vector<8x1xf32> to vector<8x32xf32>
    %91 = arith.mulf %89, %90 : vector<8x32xf32>
    %92 = vector.broadcast %70 : vector<8x1xf32> to vector<8x32xf32>
    %93 = arith.addf %91, %92 : vector<8x32xf32>
    %c0_37 = arith.constant 0 : index
    %c0_38 = arith.constant 0 : index
    %94 = vector.load %arg8[%c0_37, %c0_38] : memref<8x4xf32, #tpu.memory_space<vmem>>, vector<8x4xf32>
    %cst_39 = arith.constant dense<0.000000e+00> : vector<8x32xf32>
    %95 = tpu.matmul %94, %1, %cst_39 {dimension_numbers = #tpu.dot_dimension_numbers<[1], [0], [0], [1], [0, 0, 1, 1], [], []>} : vector<8x4xf32>, vector<4x32xf32>, vector<8x32xf32> -> vector<8x32xf32>
    %c0_40 = arith.constant 0 : index
    %c0_41 = arith.constant 0 : index
    %96 = vector.load %arg9[%c0_40, %c0_41] : memref<8x1xf32, #tpu.memory_space<vmem>>, vector<8x1xf32>
    %c0_42 = arith.constant 0 : index
    %c0_43 = arith.constant 0 : index
    %97 = vector.load %arg10[%c0_42, %c0_43] : memref<8x1xf32, #tpu.memory_space<vmem>>, vector<8x1xf32>
    %cst_44 = arith.constant dense<0.000000e+00> : vector<8xf32>
    %98 = vector.multi_reduction <add>, %95, %cst_44 [1] : vector<8x32xf32> to vector<8xf32>
    %99 = vector.shape_cast %98 : vector<8xf32> to vector<8x1xf32>
    %100 = arith.mulf %95, %95 : vector<8x32xf32>
    %cst_45 = arith.constant dense<0.000000e+00> : vector<8xf32>
    %101 = vector.multi_reduction <add>, %100, %cst_45 [1] : vector<8x32xf32> to vector<8xf32>
    %102 = vector.shape_cast %101 : vector<8xf32> to vector<8x1xf32>
    %cst_46 = arith.constant 3.125000e-02 : f32
    %103 = vector.broadcast %cst_46 : f32 to vector<8x1xf32>
    %104 = arith.mulf %99, %103 : vector<8x1xf32>
    %cst_47 = arith.constant 3.125000e-02 : f32
    %105 = vector.broadcast %cst_47 : f32 to vector<8x1xf32>
    %106 = arith.mulf %102, %105 : vector<8x1xf32>
    %107 = arith.mulf %104, %104 : vector<8x1xf32>
    %108 = arith.subf %106, %107 : vector<8x1xf32>
    %cst_48 = arith.constant 0.000000e+00 : f32
    %109 = vector.broadcast %cst_48 : f32 to vector<8x1xf32>
    %110 = arith.maximumf %108, %109 : vector<8x1xf32>
    %cst_49 = arith.constant 9.99999974E-6 : f32
    %111 = vector.broadcast %cst_49 : f32 to vector<8x1xf32>
    %112 = arith.addf %110, %111 : vector<8x1xf32>
    %113 = math.rsqrt %112 : vector<8x1xf32>
    %114 = arith.mulf %113, %96 : vector<8x1xf32>
    %115 = vector.broadcast %104 : vector<8x1xf32> to vector<8x32xf32>
    %116 = arith.subf %95, %115 : vector<8x32xf32>
    %117 = vector.broadcast %114 : vector<8x1xf32> to vector<8x32xf32>
    %118 = arith.mulf %116, %117 : vector<8x32xf32>
    %119 = vector.broadcast %97 : vector<8x1xf32> to vector<8x32xf32>
    %120 = arith.addf %118, %119 : vector<8x32xf32>
    %121 = arith.addf %93, %120 : vector<8x32xf32>
    %cst_50 = arith.constant 0.000000e+00 : f32
    %122 = vector.broadcast %cst_50 : f32 to vector<8x32xf32>
    %123 = arith.maximumf %121, %122 : vector<8x32xf32>
    %c0_51 = arith.constant 0 : index
    %c0_52 = arith.constant 0 : index
    %124 = vector.load %arg11[%c0_51, %c0_52] : memref<8x32xf32, #tpu.memory_space<vmem>>, vector<8x32xf32>
    tpu.vector_store %arg11[%c0_51, %c0_52], %123 {strides = array<i32>} : memref<8x32xf32, #tpu.memory_space<vmem>>, vector<8x32xf32>,
    return
  }
}

</mosaic_0001>

<llo_original>
// kernel: basic_block_forward.1
$region0: #{basic_block_forward.1}
  #allocation0 [shape = 'u32[]', space=smem, size = 0x4, offset = 0x4, fixed_abs, tag = 'smem constant byte address 0x4 - core index']
  #allocation1 [shape = 'u32[72,128]{1,0:T(1,128)}', space=vmem, size = 0x9000, scoped, tag = 'internal scratch']
  %s0 = inlined_call_operand.vmem [shape: s32[1,32], index: 0, kind: input, shape index: {}]
  %s1 = inlined_call_operand.vmem [shape: f32[4,32], index: 1, kind: input, shape index: {}]
  %s2 = inlined_call_operand.vmem [shape: f32[8,12], index: 2, kind: input, shape index: {}]
  %s3 = inlined_call_operand.vmem [shape: f32[8,1], index: 3, kind: input, shape index: {}]
  %s4 = inlined_call_operand.vmem [shape: f32[8,1], index: 4, kind: input, shape index: {}]
  %s5 = inlined_call_operand.vmem [shape: f32[8,24], index: 5, kind: input, shape index: {}]
  %s6 = inlined_call_operand.vmem [shape: f32[8,1], index: 6, kind: input, shape index: {}]
  %s7 = inlined_call_operand.vmem [shape: f32[8,1], index: 7, kind: input, shape index: {}]
  %s8 = inlined_call_operand.vmem [shape: f32[8,4], index: 8, kind: input, shape index: {}]
  %s9 = inlined_call_operand.vmem [shape: f32[8,1], index: 9, kind: input, shape index: {}]
  %s10 = inlined_call_operand.vmem [shape: f32[8,1], index: 10, kind: input, shape index: {}]
  %s11 = inlined_call_operand.vmem [shape: f32[8,32], index: 11, kind: output, shape index: {}]
  %s12 = sld [smem:[#allocation0]]
  $region54: #{basic_block_forward.1} parent=0
    _
  %s14 = ssub.s32 1, %s12
  %s15 = scalar_select 0, %s14, %s12
  // Predicated region
  $region2: #{basic_block_forward.1} parent=0 // pred_check
    _
  $region3: #{basic_block_forward.1} parent=0 // pred_check_branch
    %17 = sbr.rel (0) target = $region5
  $region4: #{basic_block_forward.1} parent=0 // pred_region
    _
  $region5: #{basic_block_forward.1} parent=0 // pred_fallthru
    _
  // Predicated region
  $region6: #{basic_block_forward.1} parent=0 // pred_check
    _
  $region7: #{basic_block_forward.1} parent=0 // pred_check_branch
    %19 = sbr.rel (0) target = $region9
  $region8: #{basic_block_forward.1} parent=0 // pred_region
    _
  $region9: #{basic_block_forward.1} parent=0 // pred_fallthru
    _
  // Predicated region
  $region10: #{basic_block_forward.1} parent=0 // pred_check
    _
  $region11: #{basic_block_forward.1} parent=0 // pred_check_branch
    %21 = sbr.rel (0) target = $region13
  $region12: #{basic_block_forward.1} parent=0 // pred_region
    _
  $region13: #{basic_block_forward.1} parent=0 // pred_fallthru
    _
  // Predicated region
  $region14: #{basic_block_forward.1} parent=0 // pred_check
    _
  $region15: #{basic_block_forward.1} parent=0 // pred_check_branch
    %23 = sbr.rel (0) target = $region17
  $region16: #{basic_block_forward.1} parent=0 // pred_region
    _
  $region17: #{basic_block_forward.1} parent=0 // pred_fallthru
    _
  // Predicated region
  $region18: #{basic_block_forward.1} parent=0 // pred_check
    _
  $region19: #{basic_block_forward.1} parent=0 // pred_check_branch
    %25 = sbr.rel (0) target = $region21
  $region20: #{basic_block_forward.1} parent=0 // pred_region
    _
  $region21: #{basic_block_forward.1} parent=0 // pred_fallthru
    _
  // Predicated region
  $region22: #{basic_block_forward.1} parent=0 // pred_check
    _
  $region23: #{basic_block_forward.1} parent=0 // pred_check_branch
    %27 = sbr.rel (0) target = $region25
  $region24: #{basic_block_forward.1} parent=0 // pred_region
    _
  $region25: #{basic_block_forward.1} parent=0 // pred_fallthru
    _
  // Predicated region
  $region26: #{basic_block_forward.1} parent=0 // pred_check
    _
  $region27: #{basic_block_forward.1} parent=0 // pred_check_branch
    %29 = sbr.rel (0) target = $region29
  $region28: #{basic_block_forward.1} parent=0 // pred_region
    _
  $region29: #{basic_block_forward.1} parent=0 // pred_fallthru
    _
  // Predicated region
  $region30: #{basic_block_forward.1} parent=0 // pred_check
    _
  $region31: #{basic_block_forward.1} parent=0 // pred_check_branch
    %31 = sbr.rel (0) target = $region33
  $region32: #{basic_block_forward.1} parent=0 // pred_region
    _
  $region33: #{basic_block_forward.1} parent=0 // pred_fallthru
    _
  // Predicated region
  $region34: #{basic_block_forward.1} parent=0 // pred_check
    _
  $region35: #{basic_block_forward.1} parent=0 // pred_check_branch
    %33 = sbr.rel (0) target = $region37
  $region36: #{basic_block_forward.1} parent=0 // pred_region
    _
  $region37: #{basic_block_forward.1} parent=0 // pred_fallthru
    _
  // Predicated region
  $region38: #{basic_block_forward.1} parent=0 // pred_check
    _
  $region39: #{basic_block_forward.1} parent=0 // pred_check_branch
    %35 = sbr.rel (0) target = $region41
  $region40: #{basic_block_forward.1} parent=0 // pred_region
    _
  $region41: #{basic_block_forward.1} parent=0 // pred_fallthru
    _
  // Predicated region
  $region42: #{basic_block_forward.1} parent=0 // pred_check
    _
  $region43: #{basic_block_forward.1} parent=0 // pred_check_branch
    %37 = sbr.rel (0) target = $region45
  $region44: #{basic_block_forward.1} parent=0 // pred_region
    _
  $region45: #{basic_block_forward.1} parent=0 // pred_fallthru
    _
  %v38 = vld [vmem:[%s0] sm:$0x1]
  %v39 = vld [vmem:[%s1] sm:$0xf]
  %41 = vrot.lane.b32.xlu0 %v39, 1
  %v42 = vpop.permute.xlu0 %41
  %vm44 = vcmask 7168
  %v45 = vsel %vm44, 0.0, %v42
  %46 = vrot.lane.b32.xlu0 %v39, 127
  %v47 = vpop.permute.xlu0 %46
  %vm49 = vcmask 252928
  %v50 = vsel %vm49, %v47, 0.0
  %vm51 = vcmp.eq.s32.totalorder %v38, 0
  %v52 = vsel %vm51, 1, 0
  %v53 = vperm.slane %v52, 0
  %vm54 = vcmp.eq.s32.totalorder %v53, 1
  %v55 = vsel %vm54, 0.0, %v45
  %vm56 = vcmp.eq.s32.totalorder %v38, 15
  %v57 = vsel %vm56, 1, 0
  %v58 = vperm.slane %v57, 0
  %vm59 = vcmp.eq.s32.totalorder %v58, 1
  %v60 = vsel %vm59, 0.0, %v50
  %v61 = vrot.slane %v39, 4
  %vm63 = vcmask 1043456
  %v64 = vsel %vm63, %v55, %v61
  %v65 = vld [vmem:[%s2] sm:$0xff]
  %vm66 = vcmask 97280
  %v68 = vsel %vm66, %v65, 0
  %v71 = vsel %vm63, %v60, 0
  %73 = vmatpush.msra.mxu0 0.0
  %74 = vmatpush.msra.mxu0 0.0
  %75 = vmatpush.msra.mxu0 0.0
  %76 = vmatpush.msra.mxu0 0.0
  %77 = vmatpush.msra.mxu0 0.0
  %78 = vmatpush.msra.mxu0 0.0
  %79 = vmatpush.msra.mxu0 0.0
  %80 = vmatpush.msra.mxu0 0.0
  %81 = vmatpush.msra.mxu0 0.0
  %82 = vmatpush.msra.mxu0 0.0
  %83 = vmatpush.msra.mxu0 0.0
  %84 = vmatpush.msra.mxu0 0.0
  %85 = vmatpush.msra.mxu0 0.0
  %86 = vmatpush.msra.mxu0 0.0
  %87 = vmatpush.msra.mxu0 %v71
  %88 = vmatpush.msra.mxu0 %v64
  %89 = vmatmul.f32.gmra.mxu0 %v68
  %v90 = vpop.f32.mrf.mxu0
  %v91 = vadd.f32 0.0, %v90
  %92 = vdwg.mxu0
  %v93 = vld [vmem:[%s3] sm:$0xff]
  %v94 = vld [vmem:[%s4] sm:$0xff]
  %vm95 = vcmask 261120
  %v96 = vsel %vm95, %v91, 0.0
  %97 = vadd.xlane.f32.xlu0 %v96
  %v98 = vpop.xlane.xlu0 %97
  %v99 = vmul.f32 %v91, %v91
  %v100 = vsel %vm95, %v99, 0.0
  %101 = vadd.xlane.f32.xlu0 %v100
  %v102 = vpop.xlane.xlu0 %101
  %v103 = vmul.f32 %v98, 0.03125
  %v104 = vmul.f32 %v102, 0.03125
  %v105 = vmul.f32 %v103, %v103
  %v106 = vsub.f32 %v104, %v105
  %v107 = vmax.f32 %v106, 0.0
  %v108 = vadd.f32 %v107, 1e-05
  %v109 = vrsqrt.pop %v108
  %v110 = vmul.f32 %v109, %v108
  %v111 = vmul.f32 %v110, %v109
  %v112 = vmul.f32 0.5, %v111
  %v113 = vsub.f32 1.5, %v112
  %v114 = vmul.f32 %v109, %v113
  %vm115 = vweird.f32 %v108
  %vm116 = vweird.f32 %v109
  %vm117 = vmor %vm115, %vm116
  %v118 = vsel %vm117, %v109, %v114
  %v119 = vmul.f32 %v118, %v93
  %v120 = vsub.f32 %v91, %v103
  %122 = vset.pattern.permute.xlu0 0
  %123 = vperm.xlu0 %122, %v119
  %v124 = vpop.permute.xlu0 %123
  %v126 = vmul.f32 %v120, %v124
  %128 = vset.pattern.permute.xlu0 0
  %129 = vperm.xlu0 %128, %v94
  %v130 = vpop.permute.xlu0 %129
  %v132 = vadd.f32 %v126, %v130
  %v133 = vmax.f32 %v132, 0.0
  %135 = vrot.lane.b32.xlu0 %v133, 1
  %v136 = vpop.permute.xlu0 %135
  %v138 = vsel %vm44, 0.0, %v136
  %139 = vrot.lane.b32.xlu0 %v133, 127
  %v140 = vpop.permute.xlu0 %139
  %v142 = vsel %vm49, %v140, 0.0
  %v143 = vsel %vm54, 0.0, %v138
  %v144 = vsel %vm59, 0.0, %v142
  %v145 = vld [vmem:[%s5] sm:$0xff]
  %vm146 = vcmask 195584
  %v148 = vsel %vm146, %v145, 0
  %150 = vmatpush.msra.mxu0 0.0
  %151 = vmatpush.msra.mxu0 0.0
  %152 = vmatpush.msra.mxu0 0.0
  %153 = vmatpush.msra.mxu0 0.0
  %154 = vmatpush.msra.mxu0 0.0
  %155 = vmatpush.msra.mxu0 0.0
  %156 = vmatpush.msra.mxu0 0.0
  %157 = vmatpush.msra.mxu0 0.0
  %158 = vmatpush.msra.mxu0 0.0
  %159 = vmatpush.msra.mxu0 0.0
  %160 = vmatpush.msra.mxu0 0.0
  %161 = vmatpush.msra.mxu0 0.0
  %162 = vmatpush.msra.mxu0 0.0
  %163 = vmatpush.msra.mxu0 %v144
  %164 = vmatpush.msra.mxu0 %v133
  %165 = vmatpush.msra.mxu0 %v143
  %166 = vmatmul.f32.gmra.mxu0 %v148
  %v167 = vpop.f32.mrf.mxu0
  %v168 = vadd.f32 0.0, %v167
  %169 = vdwg.mxu0
  %v170 = vld [vmem:[%s6] sm:$0xff]
  %v171 = vld [vmem:[%s7] sm:$0xff]
  %v172 = vsel %vm95, %v168, 0.0
  %173 = vadd.xlane.f32.xlu0 %v172
  %v174 = vpop.xlane.xlu0 %173
  %v175 = vmul.f32 %v168, %v168
  %v176 = vsel %vm95, %v175, 0.0
  %177 = vadd.xlane.f32.xlu0 %v176
  %v178 = vpop.xlane.xlu0 %177
  %v179 = vmul.f32 %v174, 0.03125
  %v180 = vmul.f32 %v178, 0.03125
  %v181 = vmul.f32 %v179, %v179
  %v182 = vsub.f32 %v180, %v181
  %v183 = vmax.f32 %v182, 0.0
  %v184 = vadd.f32 %v183, 1e-05
  %v185 = vrsqrt.pop %v184
  %v186 = vmul.f32 %v185, %v184
  %v187 = vmul.f32 %v186, %v185
  %v188 = vmul.f32 0.5, %v187
  %v189 = vsub.f32 1.5, %v188
  %v190 = vmul.f32 %v185, %v189
  %vm191 = vweird.f32 %v184
  %vm192 = vweird.f32 %v185
  %vm193 = vmor %vm191, %vm192
  %v194 = vsel %vm193, %v185, %v190
  %v195 = vmul.f32 %v194, %v170
  %v196 = vsub.f32 %v168, %v179
  %198 = vset.pattern.permute.xlu0 0
  %199 = vperm.xlu0 %198, %v195
  %v200 = vpop.permute.xlu0 %199
  %v202 = vmul.f32 %v196, %v200
  %204 = vset.pattern.permute.xlu0 0
  %205 = vperm.xlu0 %204, %v171
  %v206 = vpop.permute.xlu0 %205
  %v208 = vadd.f32 %v202, %v206
  %v209 = vld [vmem:[%s8] sm:$0xff]
  %vm210 = vcmask 31744
  %v212 = vsel %vm210, %v209, 0
  %v214 = vsel %vm63, %v39, 0
  %216 = vmatpush.msra.mxu0 0.0
  %217 = vmatpush.msra.mxu0 0.0
  %218 = vmatpush.msra.mxu0 0.0
  %219 = vmatpush.msra.mxu0 0.0
  %220 = vmatpush.msra.mxu0 0.0
  %221 = vmatpush.msra.mxu0 0.0
  %222 = vmatpush.msra.mxu0 0.0
  %223 = vmatpush.msra.mxu0 0.0
  %224 = vmatpush.msra.mxu0 0.0
  %225 = vmatpush.msra.mxu0 0.0
  %226 = vmatpush.msra.mxu0 0.0
  %227 = vmatpush.msra.mxu0 0.0
  %228 = vmatpush.msra.mxu0 0.0
  %229 = vmatpush.msra.mxu0 0.0
  %230 = vmatpush.msra.mxu0 0.0
  %231 = vmatpush.msra.mxu0 %v214
  %232 = vmatmul.f32.gmra.mxu0 %v212
  %v233 = vpop.f32.mrf.mxu0
  %v234 = vadd.f32 0.0, %v233
  %235 = vdwg.mxu0
  %v236 = vld [vmem:[%s9] sm:$0xff]
  %v237 = vld [vmem:[%s10] sm:$0xff]
  %v238 = vsel %vm95, %v234, 0.0
  %239 = vadd.xlane.f32.xlu0 %v238
  %v240 = vpop.xlane.xlu0 %239
  %v241 = vmul.f32 %v234, %v234
  %v242 = vsel %vm95, %v241, 0.0
  %243 = vadd.xlane.f32.xlu0 %v242
  %v244 = vpop.xlane.xlu0 %243
  %v245 = vmul.f32 %v240, 0.03125
  %v246 = vmul.f32 %v244, 0.03125
  %v247 = vmul.f32 %v245, %v245
  %v248 = vsub.f32 %v246, %v247
  %v249 = vmax.f32 %v248, 0.0
  %v250 = vadd.f32 %v249, 1e-05
  %v251 = vrsqrt.pop %v250
  %v252 = vmul.f32 %v251, %v250
  %v253 = vmul.f32 %v252, %v251
  %v254 = vmul.f32 0.5, %v253
  %v255 = vsub.f32 1.5, %v254
  %v256 = vmul.f32 %v251, %v255
  %vm257 = vweird.f32 %v250
  %vm258 = vweird.f32 %v251
  %vm259 = vmor %vm257, %vm258
  %v260 = vsel %vm259, %v251, %v256
  %v261 = vmul.f32 %v260, %v236
  %v262 = vsub.f32 %v234, %v245
  %264 = vset.pattern.permute.xlu0 0
  %265 = vperm.xlu0 %264, %v261
  %v266 = vpop.permute.xlu0 %265
  %v268 = vmul.f32 %v262, %v266
  %270 = vset.pattern.permute.xlu0 0
  %271 = vperm.xlu0 %270, %v237
  %v272 = vpop.permute.xlu0 %271
  %v274 = vadd.f32 %v268, %v272
  %v275 = vadd.f32 %v208, %v274
  %v276 = vmax.f32 %v275, 0.0
  %277 = vst.msk [vmem:[%s11] sm:$0xff] %vm95, %v276
  // Predicated region
  $region46: #{basic_block_forward.1} parent=0 // pred_check
    _
  $region47: #{basic_block_forward.1} parent=0 // pred_check_branch
    %279 = sbr.rel (0) target = $region49
  $region48: #{basic_block_forward.1} parent=0 // pred_region
    _
  $region49: #{basic_block_forward.1} parent=0 // pred_fallthru
    _
  // Predicated region
  $region50: #{basic_block_forward.1} parent=0 // pred_check
    _
  $region51: #{basic_block_forward.1} parent=0 // pred_check_branch
    %281 = sbr.rel (0) target = $region53
  $region52: #{basic_block_forward.1} parent=0 // pred_region
    _
  $region53: #{basic_block_forward.1} parent=0 // pred_fallthru
    _

</llo_original>
